<compile_context>
chip_gen: v7x
topology: tpu7x:2x2x1
jax: 0.10.0
libtpu: 0.0.40
codegen_flags: <defaults>
</compile_context>

<pallas_src>
import jax
import jax.numpy as jnp
from jax.experimental import pallas as pl
from jax.experimental.pallas import tpu as pltpu

# Pendulum-v0 dimensions (gym): obs dim 3, action dim 1, action high 2.0
S_DIM = 3
A_DIM = 1
A_MAX = 2.0

H1 = 64
H2 = 32

PF = 128          # lane width
S_PAD = 8         # padded state feature width (state + constant-1 lane)
R1 = 0            # fc1 block rows [0, 8)
R2 = 8            # fc2 block rows [8, 136)
R3 = 136          # fc3 row block  [136, 144)
W_ROWS = 144      # total packed-weight rows (multiple of 8)


def _round_up(x, m):
    return ((x + m - 1) // m) * m


def _actor_kernel(x_ref, w_ref, o_ref):
    x = x_ref[...]                      # (TB, 8)  state (+ constant-1 lane)
    w1 = w_ref[R1:R2, :]                # (8, 128)   fc1 weights + b1 row + carry
    w2 = w_ref[R2:R3, :]                # (128, 128) fc2 weights + b2 row + carry
    w3 = w_ref[R3:R3 + 1, :]            # (1, 128)   fc3 row + b3 lane

    h1 = jnp.maximum(jnp.dot(x, w1, preferred_element_type=jnp.float32), 0.0)
    h2 = jnp.maximum(jnp.dot(h1, w2, preferred_element_type=jnp.float32), 0.0)

    # fc3: single output column -> VPU multiply + lane reduction (no MXU tile).
    a = jnp.sum(h2 * w3, axis=-1, keepdims=True)        # (TB, 1) = h2 @ w3 + b3
    a = jnp.tanh(a) * A_MAX

    # Lane-dense store; real action lives in column 0 (sliced by the wrapper).
    o_ref[...] = jnp.broadcast_to(a, o_ref.shape).astype(o_ref.dtype)


def prepare_params(params):
    """Pack raw (w1,b1,w2,b2,w3,b3) into one (144,128) slab. Do this ONCE."""
    w1, b1, w2, b2, w3, b3 = params
    W = jnp.zeros((W_ROWS, PF), jnp.float32)
    # fc1 block: x_pad(.,8) @ W[0:8]  ->  h1 (128 lanes)
    W = W.at[R1:R1 + S_DIM, 0:H1].set(w1.astype(jnp.float32))
    W = W.at[R1 + S_DIM, 0:H1].set(b1.astype(jnp.float32))   # bias via const-1 lane
    W = W.at[R1 + S_DIM, H1].set(1.0)                        # carry constant to h1
    # fc2 block: h1(.,128) @ W[8:136] -> h2 (128 lanes)
    W = W.at[R2:R2 + H1, 0:H2].set(w2.astype(jnp.float32))
    W = W.at[R2 + H1, 0:H2].set(b2.astype(jnp.float32))
    W = W.at[R2 + H1, H2].set(1.0)                           # carry constant to h2
    # fc3 row: a = sum(h2 * W[136], -1)
    W = W.at[R3, 0:H2].set(w3[:, 0].astype(jnp.float32))
    W = W.at[R3, H2].set(b3[0].astype(jnp.float32))
    return W


def actor_forward(state, packed_w):
    """state: (B, S_DIM) float32; packed_w: output of prepare_params.
    Returns (B, A_DIM) float32."""
    B = state.shape[0]
    tile_b = _round_up(max(B, 8), 8) if B <= 256 else 256
    pb = _round_up(B, tile_b)
    nb = pb // tile_b

    # Per-call padding: only the (tiny) state is padded; weights are pre-packed.
    sp = jnp.zeros((pb, S_PAD), jnp.float32)
    sp = sp.at[:B, :S_DIM].set(state.astype(jnp.float32))
    sp = sp.at[:, S_DIM].set(1.0)                            # constant-1 lane

    out_p = pl.pallas_call(
        _actor_kernel,
        out_shape=jax.ShapeDtypeStruct((pb, PF), jnp.float32),
        grid=(nb,),
        in_specs=[
            pl.BlockSpec((tile_b, S_PAD), lambda i: (i, 0)),   # state tile
            pl.BlockSpec((W_ROWS, PF), lambda i: (0, 0)),      # resident weights
        ],
        out_specs=pl.BlockSpec((tile_b, PF), lambda i: (i, 0)),
        compiler_params=pltpu.CompilerParams(
            dimension_semantics=("parallel",),                 # v7x: split batch over TCs
        ),
    )(sp, packed_w)

    return out_p[:B, :A_DIM]


def init_params(key):
    """Deterministic init mimicking nn.Linear default (U[-1/sqrt(fan_in), +])."""
    def linear(key, fan_in, fan_out):
        kw, kb = jax.random.split(key)
        bound = 1.0 / jnp.sqrt(fan_in)
        # stored as [in, out] so the math is x @ W (== PyTorch x @ W.T)
        w = jax.random.uniform(kw, (fan_in, fan_out), jnp.float32, -bound, bound)
        b = jax.random.uniform(kb, (fan_out,), jnp.float32, -bound, bound)
        return w, b

    k1, k2, k3 = jax.random.split(key, 3)
    w1, b1 = linear(k1, S_DIM, H1)
    w2, b2 = linear(k2, H1, H2)
    w3, b3 = linear(k3, H2, A_DIM)
    return (w1, b1, w2, b2, w3, b3)


def _reference(state, params):
    w1, b1, w2, b2, w3, b3 = params
    x = jnp.maximum(state @ w1 + b1, 0.0)
    x = jnp.maximum(x @ w2 + b2, 0.0)
    return jnp.tanh(x @ w3 + b3) * A_MAX


if __name__ == "__main__":
    key = jax.random.PRNGKey(0)
    kp, ks, ks2 = jax.random.split(key, 3)
    params = init_params(kp)
    packed_w = jax.block_until_ready(prepare_params(params))   # pad/fold once

    fwd = jax.jit(actor_forward)

    # Small batch (inference-style)
    batch = 2
    state = jax.random.normal(ks, (batch, S_DIM), jnp.float32)
    action = jax.block_until_ready(fwd(state, packed_w))
    ref = _reference(state, params)
    assert action.shape == (batch, A_DIM), action.shape
    assert jnp.allclose(action, ref, atol=1e-5, rtol=1e-5), (action, ref)

    # Larger batch (training-style) exercises the dynamic-batch padding path.
    batch2 = 37
    state2 = jax.random.normal(ks2, (batch2, S_DIM), jnp.float32)
    action2 = jax.block_until_ready(fwd(state2, packed_w))
    ref2 = _reference(state2, params)
    assert action2.shape == (batch2, A_DIM), action2.shape
    assert jnp.allclose(action2, ref2, atol=1e-5, rtol=1e-5)

    print("KERNEL_OK")
</pallas_src>

<mosaic_0001>
module attributes {stable_mosaic.version = 11 : i64} {
  func.func @_actor_kernel(%arg0: i32, %arg1: memref<8x8xf32, #tpu.memory_space<vmem>>, %arg2: memref<144x128xf32, #tpu.memory_space<vmem>>, %arg3: memref<8x128xf32, #tpu.memory_space<vmem>>) attributes {dimension_semantics = [#tpu.dimension_semantics<parallel>], iteration_bounds = array<i64: 1>, scalar_prefetch = 0 : i64, scratch_operands = 0 : i64, tpu.core_type = #tpu.core_type<tc>, window_params = [{transform_indices = @transform_0, window_bounds = array<i64: 8, 8>}, {pipeline_mode = #tpu.pipeline_mode<synchronous>, transform_indices = @transform_1, window_bounds = array<i64: 144, 128>}, {transform_indices = @transform_2, window_bounds = array<i64: 8, 128>}]} {
    %c0 = arith.constant 0 : index
    %c0_0 = arith.constant 0 : index
    %0 = vector.load %arg1[%c0, %c0_0] : memref<8x8xf32, #tpu.memory_space<vmem>>, vector<8x8xf32>
    %c0_1 = arith.constant 0 : index
    %c0_2 = arith.constant 0 : index
    %1 = vector.load %arg2[%c0_1, %c0_2] : memref<144x128xf32, #tpu.memory_space<vmem>>, vector<8x128xf32>
    %c8 = arith.constant 8 : index
    %c0_3 = arith.constant 0 : index
    %2 = vector.load %arg2[%c8, %c0_3] : memref<144x128xf32, #tpu.memory_space<vmem>>, vector<128x128xf32>
    %c136 = arith.constant 136 : index
    %c0_4 = arith.constant 0 : index
    %3 = vector.load %arg2[%c136, %c0_4] : memref<144x128xf32, #tpu.memory_space<vmem>>, vector<1x128xf32>
    %cst = arith.constant dense<0.000000e+00> : vector<8x128xf32>
    %4 = tpu.matmul %0, %1, %cst {dimension_numbers = #tpu.dot_dimension_numbers<[1], [0], [0], [1], [0, 0, 1, 1], [], []>} : vector<8x8xf32>, vector<8x128xf32>, vector<8x128xf32> -> vector<8x128xf32>
    %cst_5 = arith.constant 0.000000e+00 : f32
    %5 = vector.broadcast %cst_5 : f32 to vector<8x128xf32>
    %6 = arith.maximumf %4, %5 : vector<8x128xf32>
    %cst_6 = arith.constant dense<0.000000e+00> : vector<8x128xf32>
    %7 = tpu.matmul %6, %2, %cst_6 {dimension_numbers = #tpu.dot_dimension_numbers<[1], [0], [0], [1], [0, 0, 1, 1], [], []>} : vector<8x128xf32>, vector<128x128xf32>, vector<8x128xf32> -> vector<8x128xf32>
    %cst_7 = arith.constant 0.000000e+00 : f32
    %8 = vector.broadcast %cst_7 : f32 to vector<8x128xf32>
    %9 = arith.maximumf %7, %8 : vector<8x128xf32>
    %10 = vector.broadcast %3 : vector<1x128xf32> to vector<8x128xf32>
    %11 = arith.mulf %9, %10 : vector<8x128xf32>
    %cst_8 = arith.constant dense<0.000000e+00> : vector<8xf32>
    %12 = vector.multi_reduction <add>, %11, %cst_8 [1] : vector<8x128xf32> to vector<8xf32>
    %13 = vector.shape_cast %12 : vector<8xf32> to vector<8x1xf32>
    %14 = math.tanh %13 : vector<8x1xf32>
    %cst_9 = arith.constant 2.000000e+00 : f32
    %15 = vector.broadcast %cst_9 : f32 to vector<8x1xf32>
    %16 = arith.mulf %14, %15 : vector<8x1xf32>
    %17 = vector.shape_cast %16 : vector<8x1xf32> to vector<8x1xf32>
    %18 = vector.broadcast %17 : vector<8x1xf32> to vector<8x128xf32>
    %c0_10 = arith.constant 0 : index
    %c0_11 = arith.constant 0 : index
    %19 = vector.load %arg3[%c0_10, %c0_11] : memref<8x128xf32, #tpu.memory_space<vmem>>, vector<8x128xf32>
    tpu.vector_store %arg3[%c0_10, %c0_11], %18 {strides = array<i32>} : memref<8x128xf32, #tpu.memory_space<vmem>>, vector<8x128xf32>,
    return
  }
  func.func @transform_0(%arg0: i32) -> (i32, i32) {
    %c0_i32 = arith.constant 0 : i32
    %c0_i32_0 = arith.constant 0 : i32
    return %arg0, %c0_i32 : i32, i32
  }
  func.func @transform_1(%arg0: i32) -> (i32, i32) {
    %c0_i32 = arith.constant 0 : i32
    %c0_i32_0 = arith.constant 0 : i32
    %c0_i32_1 = arith.constant 0 : i32
    return %c0_i32, %c0_i32_0 : i32, i32
  }
  func.func @transform_2(%arg0: i32) -> (i32, i32) {
    %c0_i32 = arith.constant 0 : i32
    %c0_i32_0 = arith.constant 0 : i32
    return %arg0, %c0_i32 : i32, i32
  }
}

</mosaic_0001>

<llo_original>
// kernel: actor_forward.1
$region0: #{actor_forward.1}
  #allocation0 [shape = 'u32[]', space=smem, size = 0x4, offset = 0x4, fixed_abs, tag = 'smem constant byte address 0x4 - core index']
  #allocation1 [shape = 'u32[144,128]{1,0:T(1,128)}', space=vmem, size = 0x12000, scoped, tag = 'internal scratch']
  %s0 = inlined_call_operand.vmem [shape: f32[8,8], index: 0, kind: input, shape index: {}]
  %s1 = inlined_call_operand.hbm [shape: f32[144,128], index: 1, kind: input, shape index: {}]
  %s2 = inlined_call_operand.vmem [shape: f32[8,128], index: 2, kind: output, shape index: {}]
  %s3 = sld [smem:[#allocation0]]
  $region22: #{actor_forward.1} parent=0
    _
  %s5 = ssub.s32 1, %s3
  %s6 = scalar_select 0, %s5, %s3
  $region1: #{actor_forward.1} parent=0
    #allocation2 [shape = 'u8[73728]{0}', space=vmem, size = 0x12000, scoped, tag = 'input window, operand 1, single buffered']
    #allocation3 [shape = 's32[1]{0}', space=sflag, size = 0x4, scoped, tag = 'scoped memory for actor_forward.1']
    %7 = vsyncpa [#allocation3], 0
    // Predicated region
    $region2: #{actor_forward.1} parent=1 // pred_check
      _
    $region3: #{actor_forward.1} parent=1 // pred_check_branch
      %9 = sbr.rel (0) target = $region5
    $region4: #{actor_forward.1} parent=1 // pred_region
      _
    $region5: #{actor_forward.1} parent=1 // pred_fallthru
      _
    // Predicated region
    $region6: #{actor_forward.1} parent=1 // pred_check
      _
    $region7: #{actor_forward.1} parent=1 // pred_check_branch
      %11 = sbr.rel (0) target = $region9
    $region8: #{actor_forward.1} parent=1 // pred_region
      %s13 = ssub.s32 2304, 2304
      %14 = vsyncadd [#allocation3], %s13
      %s15 = sshll.u32 [#allocation2], 4
      %s16 = int_to_ptr.vmem [resolvable:$true] %s15
      %21 = dma.hbm_to_vmem [thread:$0]  %s1, 2304, %s16, [#allocation3], 128, 128, 8
    $region9: #{actor_forward.1} parent=1 // pred_fallthru
      _
    // Predicated region
    $region10: #{actor_forward.1} parent=1 // pred_check
      _
    $region11: #{actor_forward.1} parent=1 // pred_check_branch
      %23 = sbr.rel (0) target = $region13
    $region12: #{actor_forward.1} parent=1 // pred_region
      %24 = dma.done [#allocation3], 2304
    $region13: #{actor_forward.1} parent=1 // pred_fallthru
      _
    %v25 = vld [vmem:[%s0] sm:$0xff]
    %v26 = vld [vmem:[#allocation2] sm:$0xff]
    %v27 = vld [vmem:[#allocation2 + $0x8] sm:$0xff]
    %v28 = vld [vmem:[#allocation2 + $0x10] sm:$0xff]
    %v29 = vld [vmem:[#allocation2 + $0x18] sm:$0xff]
    %v30 = vld [vmem:[#allocation2 + $0x20] sm:$0xff]
    %v31 = vld [vmem:[#allocation2 + $0x28] sm:$0xff]
    %v32 = vld [vmem:[#allocation2 + $0x30] sm:$0xff]
    %v33 = vld [vmem:[#allocation2 + $0x38] sm:$0xff]
    %v34 = vld [vmem:[#allocation2 + $0x40] sm:$0xff]
    %v35 = vld [vmem:[#allocation2 + $0x48] sm:$0xff]
    %v36 = vld [vmem:[#allocation2 + $0x50] sm:$0xff]
    %v37 = vld [vmem:[#allocation2 + $0x58] sm:$0xff]
    %v38 = vld [vmem:[#allocation2 + $0x60] sm:$0xff]
    %v39 = vld [vmem:[#allocation2 + $0x68] sm:$0xff]
    %v40 = vld [vmem:[#allocation2 + $0x70] sm:$0xff]
    %v41 = vld [vmem:[#allocation2 + $0x78] sm:$0xff]
    %v42 = vld [vmem:[#allocation2 + $0x80] sm:$0xff]
    %v43 = vld [vmem:[#allocation2 + $0x88] sm:$0x1]
    %vm44 = vcmask 64512
    %v46 = vsel %vm44, %v25, 0
    %48 = vmatprep.subr.mxu0 0.0
    %49 = vmatpush1.msra.mxu0 %v26
    %50 = vmatprep.subr.mxu0 0.0
    %51 = vmatpush1.msra.mxu0 0.0
    %52 = vmatprep.subr.mxu0 0.0
    %53 = vmatpush1.msra.mxu0 0.0
    %54 = vmatprep.subr.mxu0 0.0
    %55 = vmatpush1.msra.mxu0 0.0
    %56 = vmatprep.subr.mxu0 0.0
    %57 = vmatpush1.msra.mxu0 0.0
    %58 = vmatprep.subr.mxu0 0.0
    %59 = vmatpush1.msra.mxu0 0.0
    %60 = vmatprep.subr.mxu0 0.0
    %61 = vmatpush1.msra.mxu0 0.0
    %62 = vmatprep.subr.mxu0 0.0
    %63 = vmatpush1.msra.mxu0 0.0
    %64 = vmatprep.subr.mxu0 0.0
    %65 = vmatpush1.msra.mxu0 0.0
    %66 = vmatprep.subr.mxu0 0.0
    %67 = vmatpush1.msra.mxu0 0.0
    %68 = vmatprep.subr.mxu0 0.0
    %69 = vmatpush1.msra.mxu0 0.0
    %70 = vmatprep.subr.mxu0 0.0
    %71 = vmatpush1.msra.mxu0 0.0
    %72 = vmatprep.subr.mxu0 0.0
    %73 = vmatpush1.msra.mxu0 0.0
    %74 = vmatprep.subr.mxu0 0.0
    %75 = vmatpush1.msra.mxu0 0.0
    %76 = vmatprep.subr.mxu0 0.0
    %77 = vmatpush1.msra.mxu0 0.0
    %78 = vmatprep.subr.mxu0 0.0
    %79 = vmatpush1.msra.mxu0 0.0
    %80 = vmatprep.subr.mxu0 0.0
    %81 = vmatpush1.msra.mxu0 0.0
    %82 = vmatprep.subr.mxu0 0.0
    %83 = vmatpush1.msra.mxu0 0.0
    %84 = vmatprep.subr.mxu0 0.0
    %85 = vmatpush1.msra.mxu0 0.0
    %86 = vmatprep.subr.mxu0 0.0
    %87 = vmatpush1.msra.mxu0 0.0
    %88 = vmatprep.subr.mxu0 0.0
    %89 = vmatpush1.msra.mxu0 0.0
    %90 = vmatprep.subr.mxu0 0.0
    %91 = vmatpush1.msra.mxu0 0.0
    %92 = vmatprep.subr.mxu0 0.0
    %93 = vmatpush1.msra.mxu0 0.0
    %94 = vmatprep.subr.mxu0 0.0
    %95 = vmatpush1.msra.mxu0 0.0
    %96 = vmatprep.subr.mxu0 0.0
    %97 = vmatpush1.msra.mxu0 0.0
    %98 = vmatprep.subr.mxu0 0.0
    %99 = vmatpush1.msra.mxu0 0.0
    %100 = vmatprep.subr.mxu0 0.0
    %101 = vmatpush1.msra.mxu0 0.0
    %102 = vmatprep.subr.mxu0 0.0
    %103 = vmatpush1.msra.mxu0 0.0
    %104 = vmatprep.subr.mxu0 0.0
    %105 = vmatpush1.msra.mxu0 0.0
    %106 = vmatprep.subr.mxu0 0.0
    %107 = vmatpush1.msra.mxu0 0.0
    %108 = vmatprep.subr.mxu0 0.0
    %109 = vmatpush1.msra.mxu0 0.0
    %110 = vmatprep.subr.mxu0 0.0
    %111 = vmatpush1.msra.mxu0 0.0
    %112 = vmatprep.mubr.f32.mxu0 0.0
    %113 = vmatmul.mubr.f32.gmra.mrb[0].mxu0 %v46
    %v114 = vpop.f32.mrb[0].mxu0
    %v115 = vadd.f32 0.0, %v114
    %v116 = vpop.f32.mrb[0].mxu0
    %117 = vdwg.mxu0
    %v118 = vmax.f32 %v115, 0.0
    %119 = vmatprep.subr.mxu0 0.0
    %120 = vmatpush1.msra.mxu0 %v27
    %121 = vmatprep.subr.mxu0 0.0
    %122 = vmatpush1.msra.mxu0 %v28
    %123 = vmatprep.subr.mxu0 0.0
    %124 = vmatpush1.msra.mxu0 %v29
    %125 = vmatprep.subr.mxu0 0.0
    %126 = vmatpush1.msra.mxu0 %v30
    %127 = vmatprep.subr.mxu0 0.0
    %128 = vmatpush1.msra.mxu0 %v31
    %129 = vmatprep.subr.mxu0 0.0
    %130 = vmatpush1.msra.mxu0 %v32
    %131 = vmatprep.subr.mxu0 0.0
    %132 = vmatpush1.msra.mxu0 %v33
    %133 = vmatprep.subr.mxu0 0.0
    %134 = vmatpush1.msra.mxu0 %v34
    %135 = vmatprep.subr.mxu0 0.0
    %136 = vmatpush1.msra.mxu0 %v35
    %137 = vmatprep.subr.mxu0 0.0
    %138 = vmatpush1.msra.mxu0 %v36
    %139 = vmatprep.subr.mxu0 0.0
    %140 = vmatpush1.msra.mxu0 %v37
    %141 = vmatprep.subr.mxu0 0.0
    %142 = vmatpush1.msra.mxu0 %v38
    %143 = vmatprep.subr.mxu0 0.0
    %144 = vmatpush1.msra.mxu0 %v39
    %145 = vmatprep.subr.mxu0 0.0
    %146 = vmatpush1.msra.mxu0 %v40
    %147 = vmatprep.subr.mxu0 0.0
    %148 = vmatpush1.msra.mxu0 %v41
    %149 = vmatprep.subr.mxu0 0.0
    %150 = vmatpush1.msra.mxu0 %v42
    %151 = vmatprep.subr.mxu0 0.0
    %152 = vmatpush1.msra.mxu0 0.0
    %153 = vmatprep.subr.mxu0 0.0
    %154 = vmatpush1.msra.mxu0 0.0
    %155 = vmatprep.subr.mxu0 0.0
    %156 = vmatpush1.msra.mxu0 0.0
    %157 = vmatprep.subr.mxu0 0.0
    %158 = vmatpush1.msra.mxu0 0.0
    %159 = vmatprep.subr.mxu0 0.0
    %160 = vmatpush1.msra.mxu0 0.0
    %161 = vmatprep.subr.mxu0 0.0
    %162 = vmatpush1.msra.mxu0 0.0
    %163 = vmatprep.subr.mxu0 0.0
    %164 = vmatpush1.msra.mxu0 0.0
    %165 = vmatprep.subr.mxu0 0.0
    %166 = vmatpush1.msra.mxu0 0.0
    %167 = vmatprep.subr.mxu0 0.0
    %168 = vmatpush1.msra.mxu0 0.0
    %169 = vmatprep.subr.mxu0 0.0
    %170 = vmatpush1.msra.mxu0 0.0
    %171 = vmatprep.subr.mxu0 0.0
    %172 = vmatpush1.msra.mxu0 0.0
    %173 = vmatprep.subr.mxu0 0.0
    %174 = vmatpush1.msra.mxu0 0.0
    %175 = vmatprep.subr.mxu0 0.0
    %176 = vmatpush1.msra.mxu0 0.0
    %177 = vmatprep.subr.mxu0 0.0
    %178 = vmatpush1.msra.mxu0 0.0
    %179 = vmatprep.subr.mxu0 0.0
    %180 = vmatpush1.msra.mxu0 0.0
    %181 = vmatprep.subr.mxu0 0.0
    %182 = vmatpush1.msra.mxu0 0.0
    %183 = vmatprep.mubr.f32.mxu0 0.0
    %184 = vmatmul.mubr.f32.gmra.mrb[0].mxu0 %v118
    %v185 = vpop.f32.mrb[0].mxu0
    %v186 = vadd.f32 0.0, %v185
    %v187 = vpop.f32.mrb[0].mxu0
    %188 = vdwg.mxu0
    %v189 = vmax.f32 %v186, 0.0
    %v190 = vlaneseq
    %v191 = vshrl.u32 %v190, 7
    %v192 = vsub.s32 0, %v191
    %v193 = vrot.slane %v43, %v192
    %v194 = vmul.f32 %v189, %v193
    %195 = vadd.xlane.f32.xlu0 %v194
    %v196 = vpop.xlane.xlu0 %195
    %v197 = vtanh.pop %v196
    %v198 = vmul.f32 %v197, 2.0
    %199 = vst [vmem:[%s2] sm:$0xff] %v198
    // Predicated region
    $region14: #{actor_forward.1} parent=1 // pred_check
      _
    $region15: #{actor_forward.1} parent=1 // pred_check_branch
      %201 = sbr.rel (0) target = $region17
    $region16: #{actor_forward.1} parent=1 // pred_region
      _
    $region17: #{actor_forward.1} parent=1 // pred_fallthru
      _
    // Predicated region
    $region18: #{actor_forward.1} parent=1 // pred_check
      _
    $region19: #{actor_forward.1} parent=1 // pred_check_branch
      %203 = sbr.rel (0) target = $region21
    $region20: #{actor_forward.1} parent=1 // pred_region
      _
    $region21: #{actor_forward.1} parent=1 // pred_fallthru
      _
    %204 = vsyncpa [#allocation3], 1

</llo_original>
